<compile_context>
chip_gen: v7x
topology: tpu7x:2x2x1
jax: 0.10.0
libtpu: 0.0.40
codegen_flags: <defaults>
</compile_context>

<pallas_src>
import jax
import jax.numpy as jnp
from jax.experimental import pallas as pl
from jax.experimental.pallas import tpu as pltpu


def _pwdp_kernel_resident_k(x_ref, k_ref, o_ref):
    # x_ref: (c, thw)    k_ref: (n, cout, c) VMEM-resident    o_ref: (cout, thw)
    b = pl.program_id(1)  # grid = (num_hw_tiles, n)
    o_ref[...] = jnp.dot(
        k_ref[b], x_ref[...], preferred_element_type=jnp.float32
    ).astype(o_ref.dtype)


def _pwdp_kernel_streamed_k(x_ref, k_ref, o_ref):
    # x_ref: (c, thw)    k_ref: (cout, c)    o_ref: (cout, thw)
    o_ref[...] = jnp.dot(
        k_ref[...], x_ref[...], preferred_element_type=jnp.float32
    ).astype(o_ref.dtype)


def _vmem_capacity_bytes() -> int:
    """Physical VMEM per TensorCore; conservative fallback if the query fails."""
    try:
        return int(pltpu.get_tpu_info().vmem_capacity_bytes)
    except Exception:
        return 128 * 1024 * 1024  # v5e/v6e size; v7x detection falls back safely


def pixel_wise_dot_product(x, K, *, hw_tile: int | None = None,
                           x_buffers: int | None = None):
    """x: (n, c, h, w), K: (n, cout, c) -> (n, cout, h, w).

    hw_tile:   optional explicit pixel-tile override (multiple of 128, or >= h*w).
    x_buffers: optional pipeline depth for the streamed x operand (e.g. 3 on v5e).
    """
    n, c, h, w = x.shape
    kn, cout, ck = K.shape
    assert c == ck, (
        "Number of channels in x and Embedding dimension (at dim 2) of K "
        "matrix must match"
    )
    assert kn == n, "Batch dims of x and K must match"

    hw = h * w
    x_flat = x.reshape(n, c, hw)
    itemsize = jnp.dtype(x.dtype).itemsize

    # ---- Per-generation VMEM budget --------------------------------------
    capacity = _vmem_capacity_bytes()
    # ~48 MiB scoped on v7x (64 MiB physical), ~100 MiB on v5e/v6e (128 MiB).
    scoped_cap = max(32 * 1024 * 1024,
                     min(capacity - 16 * 1024 * 1024, 100 * 1024 * 1024))
    data_budget = scoped_cap // 2  # leave headroom for K + compiler internals

    # Bytes per output lane staged each grid step: double-buffered x and out
    # tiles plus the live f32 dot intermediate (matters for bf16 inputs).
    per_lane = 2 * (c + cout) * itemsize + cout * 4

    # ---- hw tile selection (budget-driven, lane-dense) --------------------
    if hw_tile is not None:
        thw = hw if hw_tile >= hw else hw_tile
        assert thw == hw or thw % 128 == 0, "hw_tile must be a multiple of 128"
    else:
        max_thw = max(512, (data_budget // per_lane) // 128 * 128)
        thw = hw if hw <= max_thw else max_thw  # full dim is always legal
    num_hw_tiles = pl.cdiv(hw, thw)

    # ---- K residency -------------------------------------------------------
    k_bytes = n * cout * c * itemsize
    resident_k = k_bytes <= 8 * 1024 * 1024  # essentially always true for Udepth

    # ---- VMEM footprint -> scoped limit ------------------------------------
    bufs_x = x_buffers if x_buffers is not None else 2
    x_tile_b = c * thw * itemsize
    o_tile_b = cout * thw * itemsize
    acc_b = cout * thw * 4  # f32 MXU result before cast-back
    k_block_b = k_bytes if resident_k else 2 * cout * c * itemsize
    footprint = bufs_x * x_tile_b + 2 * o_tile_b + acc_b + k_block_b
    vmem_limit_bytes = int(min(scoped_cap,
                               max(16 * 1024 * 1024,
                                   footprint + footprint // 2 + (4 << 20))))

    # ---- Block specs -------------------------------------------------------
    x_spec_kwargs = {}
    if x_buffers is not None and x_buffers != 2:
        x_spec_kwargs = dict(pipeline_mode=pl.Buffered(x_buffers))

    if resident_k:
        # hw-tile axis leads so the megacore split (v7x) has many steps to
        # balance even when n is 1 / odd.  K is fetched once (constant index).
        grid = (num_hw_tiles, n)
        in_specs = [
            pl.BlockSpec((pl.Squeezed(), c, thw), lambda j, b: (b, 0, j),
                         **x_spec_kwargs),
            pl.BlockSpec((n, cout, c), lambda j, b: (0, 0, 0)),
        ]
        out_specs = pl.BlockSpec((pl.Squeezed(), cout, thw),
                                 lambda j, b: (b, 0, j))
        kernel = _pwdp_kernel_resident_k
    else:
        # Fallback for very large K: stream per-batch K, batch axis outermost
        # so K is only re-fetched at batch boundaries.
        grid = (n, num_hw_tiles)
        in_specs = [
            pl.BlockSpec((pl.Squeezed(), c, thw), lambda b, j: (b, 0, j),
                         **x_spec_kwargs),
            pl.BlockSpec((pl.Squeezed(), cout, c), lambda b, j: (b, 0, 0)),
        ]
        out_specs = pl.BlockSpec((pl.Squeezed(), cout, thw),
                                 lambda b, j: (b, 0, j))
        kernel = _pwdp_kernel_streamed_k

    cost = pl.CostEstimate(
        flops=2 * n * cout * c * hw,
        transcendentals=0,
        bytes_accessed=itemsize * (n * c * hw + n * cout * c + n * cout * hw),
    )

    out_flat = pl.pallas_call(
        kernel,
        out_shape=jax.ShapeDtypeStruct((n, cout, hw), x.dtype),
        grid_spec=pltpu.PrefetchScalarGridSpec(
            num_scalar_prefetch=0,
            grid=grid,
            in_specs=in_specs,
            out_specs=out_specs,
        ),
        compiler_params=pltpu.CompilerParams(
            dimension_semantics=("parallel", "parallel"),
            vmem_limit_bytes=vmem_limit_bytes,
        ),
        cost_estimate=cost,
    )(x_flat, K)

    return out_flat.reshape(n, cout, h, w)


if __name__ == "__main__":
    key = jax.random.PRNGKey(0)
    kx, kk = jax.random.split(key)

    # Small demo shapes consistent with the module.
    n, c, h, w = 2, 4, 16, 16
    cout = 8

    x = jax.random.normal(kx, (n, c, h, w), dtype=jnp.float32)
    K = jax.random.normal(kk, (n, cout, c), dtype=jnp.float32)
    ref = jnp.einsum("nchw,noc->nohw", x, K)

    # 1) Default budget-driven path (hw fits a single lane-dense tile here).
    out = pixel_wise_dot_product(x, K)
    jax.block_until_ready(out)
    assert out.shape == (n, cout, h, w)
    assert jnp.allclose(out, ref, atol=1e-5, rtol=1e-5)

    # 2) Explicit 128-wide hw tiles (exercises the streaming / multi-tile path).
    out_tiled = pixel_wise_dot_product(x, K, hw_tile=128)
    jax.block_until_ready(out_tiled)
    assert jnp.allclose(out_tiled, ref, atol=1e-5, rtol=1e-5)

    # 3) Partial last hw tile (hw = 144, not a multiple of the tile size).
    h2, w2 = 12, 12
    x2 = jax.random.normal(kx, (n, c, h2, w2), dtype=jnp.float32)
    ref2 = jnp.einsum("nchw,noc->nohw", x2, K)
    out2 = pixel_wise_dot_product(x2, K, hw_tile=128)
    jax.block_until_ready(out2)
    assert out2.shape == (n, cout, h2, w2)
    assert jnp.allclose(out2, ref2, atol=1e-5, rtol=1e-5)

    # 4) bf16 end-to-end (recommended dtype for this HBM-bound kernel).
    xb = x.astype(jnp.bfloat16)
    Kb = K.astype(jnp.bfloat16)
    refb = jnp.einsum("nchw,noc->nohw",
                      xb.astype(jnp.float32), Kb.astype(jnp.float32))
    outb = pixel_wise_dot_product(xb, Kb)
    jax.block_until_ready(outb)
    assert outb.dtype == jnp.bfloat16
    assert jnp.allclose(outb.astype(jnp.float32), refb, atol=1.5e-1, rtol=5e-2)

    print("KERNEL_OK")
</pallas_src>

<mosaic_0001>
module attributes {stable_mosaic.version = 11 : i64} {
  func.func @_pwdp_kernel_resident_k(%arg0: i32, %arg1: i32, %arg2: memref<1x4x256xf32, #tpu.memory_space<vmem>>, %arg3: memref<2x8x4xf32, #tpu.memory_space<vmem>>, %arg4: memref<1x8x256xf32, #tpu.memory_space<vmem>>) attributes {dimension_semantics = [#tpu.dimension_semantics<parallel>, #tpu.dimension_semantics<parallel>], iteration_bounds = array<i64: 1, 2>, scalar_prefetch = 0 : i64, scratch_operands = 0 : i64, tpu.core_type = #tpu.core_type<tc>, window_params = [{transform_indices = @transform_0, window_bounds = array<i64: 1, 4, 256>}, {pipeline_mode = #tpu.pipeline_mode<synchronous>, transform_indices = @transform_1, window_bounds = array<i64: 2, 8, 4>}, {transform_indices = @transform_2, window_bounds = array<i64: 1, 8, 256>}]} {
    %0 = arith.index_cast %arg1 : i32 to index
    %c0 = arith.constant 0 : index
    %c0_0 = arith.constant 0 : index
    %1 = vector.load %arg3[%0, %c0, %c0_0] : memref<2x8x4xf32, #tpu.memory_space<vmem>>, vector<1x8x4xf32>
    %2 = vector.shape_cast %1 : vector<1x8x4xf32> to vector<8x4xf32>
    %c0_1 = arith.constant 0 : index
    %c0_2 = arith.constant 0 : index
    %c0_3 = arith.constant 0 : index
    %3 = vector.load %arg2[%c0_1, %c0_2, %c0_3] : memref<1x4x256xf32, #tpu.memory_space<vmem>>, vector<1x4x256xf32>
    %4 = vector.shape_cast %3 : vector<1x4x256xf32> to vector<4x256xf32>
    %cst = arith.constant dense<0.000000e+00> : vector<8x256xf32>
    %5 = tpu.matmul %2, %4, %cst {dimension_numbers = #tpu.dot_dimension_numbers<[1], [0], [0], [1], [0, 0, 1, 1], [], []>} : vector<8x4xf32>, vector<4x256xf32>, vector<8x256xf32> -> vector<8x256xf32>
    %c0_4 = arith.constant 0 : index
    %c0_5 = arith.constant 0 : index
    %c0_6 = arith.constant 0 : index
    %6 = vector.load %arg4[%c0_4, %c0_5, %c0_6] : memref<1x8x256xf32, #tpu.memory_space<vmem>>, vector<1x8x256xf32>
    %7 = vector.shape_cast %6 : vector<1x8x256xf32> to vector<8x256xf32>
    %8 = vector.shape_cast %5 : vector<8x256xf32> to vector<1x8x256xf32>
    tpu.vector_store %arg4[%c0_4, %c0_5, %c0_6], %8 {strides = array<i32>} : memref<1x8x256xf32, #tpu.memory_space<vmem>>, vector<1x8x256xf32>,
    return
  }
  func.func @transform_0(%arg0: i32, %arg1: i32) -> (i32, i32, i32) {
    %c0_i32 = arith.constant 0 : i32
    %c0_i32_0 = arith.constant 0 : i32
    return %arg1, %c0_i32, %arg0 : i32, i32, i32
  }
  func.func @transform_1(%arg0: i32, %arg1: i32) -> (i32, i32, i32) {
    %c0_i32 = arith.constant 0 : i32
    %c0_i32_0 = arith.constant 0 : i32
    %c0_i32_1 = arith.constant 0 : i32
    %c0_i32_2 = arith.constant 0 : i32
    return %c0_i32, %c0_i32_0, %c0_i32_1 : i32, i32, i32
  }
  func.func @transform_2(%arg0: i32, %arg1: i32) -> (i32, i32, i32) {
    %c0_i32 = arith.constant 0 : i32
    %c0_i32_0 = arith.constant 0 : i32
    return %arg1, %c0_i32, %arg0 : i32, i32, i32
  }
}

</mosaic_0001>

<llo_original>
// kernel: tpu_custom_call.1
$region0: #{tpu_custom_call.1}
  #allocation0 [shape = 'u32[]', space=smem, size = 0x4, offset = 0x4, fixed_abs, tag = 'smem constant byte address 0x4 - core index']
  #allocation1 [shape = 'u32[144,128]{1,0:T(1,128)}', space=vmem, size = 0x12000, scoped, tag = 'internal scratch']
  %s0 = inlined_call_operand.vmem [shape: f32[2,4,256], index: 0, kind: input, shape index: {}]
  %s1 = inlined_call_operand.vmem [shape: f32[2,8,4], index: 1, kind: input, shape index: {}]
  %s2 = inlined_call_operand.hbm [shape: f32[2,8,256], index: 2, kind: output, shape index: {}]
  %s3 = sld [smem:[#allocation0]]
  $region41: #{tpu_custom_call.1} parent=0
    _
  %s5 = ssub.s32 1, %s3
  %s6 = scalar_select 0, %s5, %s3
  $region1: #{tpu_custom_call.1} parent=0
    #allocation2 [shape = 'u8[16384]{0}', space=vmem, size = 0x4000, scoped, tag = 'output window, operand 0']
    #allocation3 [shape = 's32[2]{0}', space=sflag, size = 0x8, scoped, tag = 'scoped memory for tpu_custom_call.1']
    %7 = vsyncpa [#allocation3], 0
    %s8 = scalar_lea.sflag [#allocation3], 1
    %9 = vsyncpa %s8, 0
    loop: start=0, step=1, limit=4
    $region2: #{tpu_custom_call.1} parent=1 // loop_pre_header
      _
    $region3: #{tpu_custom_call.1} parent=1 // loop_header
      %s11 = sphi 0, %s15
      %p12 = scmp.ge.s32.totalorder %s11, 4
      %s18 = sphi 0, %s30
      %s19 = sphi 0, %s26
      %s20 = sphi 0, %s18
      %s21 = sphi 0, %s19
      %s22 = sphi 0, %s20
      %s23 = sphi 0, %s21
      %s35 = sphi 0, %s37
      %s38 = sphi 0, %s35
      %s39 = sphi 0, %s38
      %s55 = sphi 0, %s39
      %s59 = sphi 0, %s59
      %s61 = sphi 0, %s59
      %s62 = sphi 0, %s61
      %s76 = sphi 0, %s62
      %s84 = sphi 0, %s86
      %s87 = sphi 0, %s84
      %s88 = sphi 0, %s87
      %s104 = sphi 0, %s88
    $region4: #{tpu_custom_call.1} parent=1 // loop_header_branch
      %14 = sbr.rel (%p12) target = $region8
    $region5: #{tpu_custom_call.1} parent=1 // loop_body
      %s16 = ssub.s32 %s11, 1
      %s17 = ssub.s32 %s11, 2
      %s24 = sadd.s32 1, %s19
      %p25 = scmp.ge.s32.totalorder %s24, 2
      %s26 = scalar_select %p25, 0, %s24
      %s27 = sadd.s32 1, %s18
      %s28 = scalar_select %p25, %s27, %s18
      %p29 = scmp.ge.s32.totalorder %s28, 1
      %s30 = scalar_select %p29, 0, %s28
      %s31 = ssub.s32 %s19, %s26
      %s32 = ssub.s32 %s18, %s30
      %s33 = sor.u32 %s31, %s32
      %p34 = scmp.eq.s32.totalorder %s33, 0
      %s36 = sadd.s32 %s35, 1
      %s37 = scalar_select %p34, %s35, %s36
      %p40 = pneg %p34
      %p41 = scmp.eq.s32.totalorder %s11, 1
      %p42 = por %p40, %p41
      %p43 = scmp.ne.s32.totalorder %s35, %s38
      %p44 = scmp.eq.s32.totalorder %s11, 0
      %p45 = por %p43, %p44
      %p46 = scmp.ne.s32.totalorder %s35, %s38
      %p47 = scmp.eq.s32.totalorder %s16, 1
      %p48 = por %p46, %p47
      %p49 = scmp.ne.s32.totalorder %s38, %s39
      %p50 = scmp.eq.s32.totalorder %s16, 0
      %p51 = por %p49, %p50
      %p52 = scmp.ne.s32.totalorder %s38, %s39
      %p53 = scmp.eq.s32.totalorder %s17, 1
      %p54 = por %p52, %p53
      %p56 = scmp.ne.s32.totalorder %s39, %s55
      %p57 = scmp.eq.s32.totalorder %s17, 0
      %p58 = por %p56, %p57
      %s60 = sadd.s32 %s59, 1
      %p63 = scmp.eq.s32.totalorder %s11, 1
      %p64 = scmp.ne.s32.totalorder %s59, %s61
      %p65 = scmp.eq.s32.totalorder %s11, 0
      %p66 = por %p64, %p65
      %p67 = scmp.ne.s32.totalorder %s59, %s61
      %p68 = scmp.eq.s32.totalorder %s16, 1
      %p69 = por %p67, %p68
      %p70 = scmp.ne.s32.totalorder %s61, %s62
      %p71 = scmp.eq.s32.totalorder %s16, 0
      %p72 = por %p70, %p71
      %p73 = scmp.ne.s32.totalorder %s61, %s62
      %p74 = scmp.eq.s32.totalorder %s17, 1
      %p75 = por %p73, %p74
      %p77 = scmp.ne.s32.totalorder %s62, %s76
      %p78 = scmp.eq.s32.totalorder %s17, 0
      %p79 = por %p77, %p78
      %s80 = ssub.s32 %s19, %s26
      %s81 = ssub.s32 %s18, %s30
      %s82 = sor.u32 %s80, %s81
      %p83 = scmp.eq.s32.totalorder %s82, 0
      %s85 = sadd.s32 %s84, 1
      %s86 = scalar_select %p83, %s84, %s85
      %p89 = pneg %p83
      %p90 = scmp.eq.s32.totalorder %s11, 1
      %p91 = por %p89, %p90
      %p92 = scmp.ne.s32.totalorder %s84, %s87
      %p93 = scmp.eq.s32.totalorder %s11, 0
      %p94 = por %p92, %p93
      %p95 = scmp.ne.s32.totalorder %s84, %s87
      %p96 = scmp.eq.s32.totalorder %s16, 1
      %p97 = por %p95, %p96
      %p98 = scmp.ne.s32.totalorder %s87, %s88
      %p99 = scmp.eq.s32.totalorder %s16, 0
      %p100 = por %p98, %p99
      %p101 = scmp.ne.s32.totalorder %s87, %s88
      %p102 = scmp.eq.s32.totalorder %s17, 1
      %p103 = por %p101, %p102
      %p105 = scmp.ne.s32.totalorder %s88, %s104
      %p106 = scmp.eq.s32.totalorder %s17, 0
      %p107 = por %p105, %p106
      %p108 = scmp.le.s32.totalorder 1, %s11
      %p109 = scmp.lt.s32.totalorder %s11, 3
      %p110 = pnand %p108, %p109
      %p111 = pneg %p110
      // Predicated region
      $region9: #{tpu_custom_call.1} parent=5 // pred_check
        _
      $region10: #{tpu_custom_call.1} parent=5 // pred_check_branch
        %113 = sbr.rel (%p110) target = $region12
      $region11: #{tpu_custom_call.1} parent=5 // pred_region
        %s114 = ssub.s32 %s11, 1
        // Predicated region
        $region13: #{tpu_custom_call.1} parent=11 // pred_check
          %p115 = pneg %p72
        $region14: #{tpu_custom_call.1} parent=11 // pred_check_branch
          %117 = sbr.rel (%p115) target = $region16
        $region15: #{tpu_custom_call.1} parent=11 // pred_region
          _
        $region16: #{tpu_custom_call.1} parent=11 // pred_fallthru
          _
      $region12: #{tpu_custom_call.1} parent=5 // pred_fallthru
        _
      %p118 = scmp.lt.s32.totalorder %s11, 2
      // Predicated region
      $region17: #{tpu_custom_call.1} parent=5 // pred_check
        %p119 = pneg %p118
      $region18: #{tpu_custom_call.1} parent=5 // pred_check_branch
        %121 = sbr.rel (%p119) target = $region20
      $region19: #{tpu_custom_call.1} parent=5 // pred_region
        // Predicated region
        $region21: #{tpu_custom_call.1} parent=19 // pred_check
          %p122 = pneg %p45
        $region22: #{tpu_custom_call.1} parent=19 // pred_check_branch
          %124 = sbr.rel (%p122) target = $region24
        $region23: #{tpu_custom_call.1} parent=19 // pred_region
          %s125 = smul.u32 2, %s18
          %p126 = scmp.lt.s32.totalorder %s19, 1
          %s127 = scalar_select %p126, %s19, 1
          %p128 = scmp.lt.s32.totalorder %s125, 1
          %s129 = scalar_select %p128, %s125, 1
          %s130 = smul.addr %s127, 2
          %s131 = sadd.s32 %s129, %s130
          %s132 = smul.addr %s131, 4
          %s133 = scalar_lea.vmem %s0, %s132
          %s134 = smul.u32 2, %s18
        $region24: #{tpu_custom_call.1} parent=19 // pred_fallthru
          _
      $region20: #{tpu_custom_call.1} parent=5 // pred_fallthru
        _
      %p135 = scmp.le.s32.totalorder 1, %s11
      %p136 = scmp.lt.s32.totalorder %s11, 3
      %p137 = pnand %p135, %p136
      %p138 = pneg %p137
      // Predicated region
      $region25: #{tpu_custom_call.1} parent=5 // pred_check
        _
      $region26: #{tpu_custom_call.1} parent=5 // pred_check_branch
        %140 = sbr.rel (%p137) target = $region28
      $region27: #{tpu_custom_call.1} parent=5 // pred_region
        %s141 = ssub.s32 %s11, 1
        %s142 = smul.u32 2, %s20
        %p143 = scmp.lt.s32.totalorder %s21, 1
        %s144 = scalar_select %p143, %s21, 1
        %p145 = scmp.lt.s32.totalorder %s142, 1
        %s146 = scalar_select %p145, %s142, 1
        %s147 = smul.addr %s144, 2
        %s148 = sadd.s32 %s146, %s147
        %s149 = smul.addr %s148, 4
        %s150 = scalar_lea.vmem %s0, %s149
        %p151 = pneg %p51
        %p152 = pneg %p48
        %p153 = pneg %p72
        %p154 = pneg %p69
        %p155 = pneg %p100
        %p156 = pneg %p97
        %s157 = sand.u32 %s87, 1
        %s158 = scalar_lea.sflag [#allocation3], %s157
        %s159 = sand.u32 %s87, 1
        %s160 = smul.addr %s159, 16
        %s161 = scalar_lea.vmem [#allocation2], %s160
        %s162 = smul.u32 2, %s20
        %p163 = scmp.lt.s32.totalorder %s21, 1
        %s164 = scalar_select %p163, %s21, 1
        %p165 = scmp.lt.s32.totalorder %s162, 1
        %s166 = scalar_select %p165, %s162, 1
        %s167 = smul.addr %s164, 2
        %s168 = sadd.s32 %s166, %s167
        %s169 = smul.addr %s168, 4
        %s170 = scalar_lea.vmem %s0, %s169
        %s171 = smul.u32 2, %s20
        %s172 = smul.u32 2, %s20
        %s173 = smul.u32 %s21, 8
        %s174 = scalar_lea.vmem %s1, %s173
        %v175 = vld [vmem:[%s174] sm:$0xff]
        %v176 = vld [vmem:[%s170] sm:$0xff]
        %v178 = vcombine.high %v176, %v176
        %vm179 = vcmask 31744
        %v181 = vsel %vm179, %v175, 0
        %vm183 = vcmask 1043456
        %v184 = vsel %vm183, %v176, 0
        %v186 = vsel %vm183, %v178, 0
        %188 = vmatprep.subr.mxu0 %v186
        %189 = vmatpush1.msra.mxu0 %v184
        %190 = vmatprep.subr.mxu0 0.0
        %191 = vmatpush1.msra.mxu0 0.0
        %192 = vmatprep.subr.mxu0 0.0
        %193 = vmatpush1.msra.mxu0 0.0
        %194 = vmatprep.subr.mxu0 0.0
        %195 = vmatpush1.msra.mxu0 0.0
        %196 = vmatprep.subr.mxu0 0.0
        %197 = vmatpush1.msra.mxu0 0.0
        %198 = vmatprep.subr.mxu0 0.0
        %199 = vmatpush1.msra.mxu0 0.0
        %200 = vmatprep.subr.mxu0 0.0
        %201 = vmatpush1.msra.mxu0 0.0
        %202 = vmatprep.subr.mxu0 0.0
        %203 = vmatpush1.msra.mxu0 0.0
        %204 = vmatprep.subr.mxu0 0.0
        %205 = vmatpush1.msra.mxu0 0.0
        %206 = vmatprep.subr.mxu0 0.0
        %207 = vmatpush1.msra.mxu0 0.0
        %208 = vmatprep.subr.mxu0 0.0
        %209 = vmatpush1.msra.mxu0 0.0
        %210 = vmatprep.subr.mxu0 0.0
        %211 = vmatpush1.msra.mxu0 0.0
        %212 = vmatprep.subr.mxu0 0.0
        %213 = vmatpush1.msra.mxu0 0.0
        %214 = vmatprep.subr.mxu0 0.0
        %215 = vmatpush1.msra.mxu0 0.0
        %216 = vmatprep.subr.mxu0 0.0
        %217 = vmatpush1.msra.mxu0 0.0
        %218 = vmatprep.subr.mxu0 0.0
        %219 = vmatpush1.msra.mxu0 0.0
        %220 = vmatprep.subr.mxu0 0.0
        %221 = vmatpush1.msra.mxu0 0.0
        %222 = vmatprep.subr.mxu0 0.0
        %223 = vmatpush1.msra.mxu0 0.0
        %224 = vmatprep.subr.mxu0 0.0
        %225 = vmatpush1.msra.mxu0 0.0
        %226 = vmatprep.subr.mxu0 0.0
        %227 = vmatpush1.msra.mxu0 0.0
        %228 = vmatprep.subr.mxu0 0.0
        %229 = vmatpush1.msra.mxu0 0.0
        %230 = vmatprep.subr.mxu0 0.0
        %231 = vmatpush1.msra.mxu0 0.0
        %232 = vmatprep.subr.mxu0 0.0
        %233 = vmatpush1.msra.mxu0 0.0
        %234 = vmatprep.subr.mxu0 0.0
        %235 = vmatpush1.msra.mxu0 0.0
        %236 = vmatprep.subr.mxu0 0.0
        %237 = vmatpush1.msra.mxu0 0.0
        %238 = vmatprep.subr.mxu0 0.0
        %239 = vmatpush1.msra.mxu0 0.0
        %240 = vmatprep.subr.mxu0 0.0
        %241 = vmatpush1.msra.mxu0 0.0
        %242 = vmatprep.subr.mxu0 0.0
        %243 = vmatpush1.msra.mxu0 0.0
        %244 = vmatprep.subr.mxu0 0.0
        %245 = vmatpush1.msra.mxu0 0.0
        %246 = vmatprep.subr.mxu0 0.0
        %247 = vmatpush1.msra.mxu0 0.0
        %248 = vmatprep.subr.mxu0 0.0
        %249 = vmatpush1.msra.mxu0 0.0
        %250 = vmatprep.subr.mxu0 0.0
        %251 = vmatpush1.msra.mxu0 0.0
        %252 = vmatprep.mubr.f32.mxu0 0.0
        %253 = vmatmul.mubr.f32.gmra.mrb[0].mxu0 %v181
        %v254 = vpop.f32.mrb[0].mxu0
        %v255 = vadd.f32 0.0, %v254
        %v256 = vpop.f32.mrb[0].mxu0
        %v257 = vadd.f32 0.0, %v256
        %258 = vdwg.mxu0
        %259 = vst [vmem:[%s161] sm:$0xff] %v255
        %260 = vst [vmem:[%s161 + $0x8] sm:$0xff] %v257
        %s261 = sand.u32 %s87, 1
        %s262 = scalar_lea.sflag [#allocation3], %s261
        %s263 = sand.u32 %s87, 1
        %s264 = smul.addr %s263, 16
        %s265 = scalar_lea.vmem [#allocation2], %s264
        // Predicated region
        $region29: #{tpu_custom_call.1} parent=27 // pred_check
          %p266 = pneg %p97
        $region30: #{tpu_custom_call.1} parent=27 // pred_check_branch
          %268 = sbr.rel (%p266) target = $region32
        $region31: #{tpu_custom_call.1} parent=27 // pred_region
          %s269 = smul.u32 2, %s20
          %s271 = ssub.s32 256, 256
          %272 = vsyncadd %s262, %s271
          %s273 = smul.addr %s21, 2
          %s274 = sadd.s32 %s269, %s273
          %s275 = smul.addr %s274, 128
          %s276 = scalar_lea.hbm %s2, %s275
          %s278 = sshll.u32 %s265, 4
          %s279 = int_to_ptr.vmem [resolvable:$true] %s278
          %281 = dma.vmem_to_hbm [thread:$0]  %s279, 256, %s276, %s262
        $region32: #{tpu_custom_call.1} parent=27 // pred_fallthru
          _
      $region28: #{tpu_custom_call.1} parent=5 // pred_fallthru
        _
      %p282 = scmp.le.s32.totalorder 2, %s11
      // Predicated region
      $region33: #{tpu_custom_call.1} parent=5 // pred_check
        %p283 = pneg %p282
      $region34: #{tpu_custom_call.1} parent=5 // pred_check_branch
        %285 = sbr.rel (%p283) target = $region36
      $region35: #{tpu_custom_call.1} parent=5 // pred_region
        %s286 = ssub.s32 %s11, 2
        // Predicated region
        $region37: #{tpu_custom_call.1} parent=35 // pred_check
          %p287 = pneg %p103
        $region38: #{tpu_custom_call.1} parent=35 // pred_check_branch
          %289 = sbr.rel (%p287) target = $region40
        $region39: #{tpu_custom_call.1} parent=35 // pred_region
          %s290 = sand.u32 %s88, 1
          %s291 = scalar_lea.sflag [#allocation3], %s290
          %s292 = sand.u32 %s88, 1
          %s293 = smul.addr %s292, 16
          %s294 = scalar_lea.vmem [#allocation2], %s293
          %295 = dma.done %s291, 256
        $region40: #{tpu_custom_call.1} parent=35 // pred_fallthru
          _
      $region36: #{tpu_custom_call.1} parent=5 // pred_fallthru
        _
    $region6: #{tpu_custom_call.1} parent=1 // loop_footer
      %s15 = sadd.s32 1, %s11
    $region7: #{tpu_custom_call.1} parent=1 // loop_footer_branch
      %10 = sbr.rel target = $region3
    $region8: #{tpu_custom_call.1} parent=1 // loop_exit
      _
    %296 = vsyncpa [#allocation3], 1
    %s297 = scalar_lea.sflag [#allocation3], 1
    %298 = vsyncpa %s297, 1

</llo_original>
